<compile_context>
chip_gen: v5e
topology: v5e:2x2
jax: 0.10.0
libtpu: 0.0.40
codegen_flags: <defaults>
</compile_context>

<pallas_src>
import functools

import numpy as np

import jax
import jax.numpy as jnp
from jax.experimental import pallas as pl
from jax.experimental.pallas import tpu as pltpu


def better_lstm_kernel(idx_ref, xg_tbl_ref, w_hh_t_ref, w_fc_t_ref, b_fc_ref,
                       out_ref, *, seq_len, hidden_size):
    """LSTM recurrence over pre-projected gate inputs + final Linear."""
    H = hidden_size

    # Recurrent weight loaded once, resident in vregs across all unrolled steps.
    w_hh = w_hh_t_ref[...]                                             # (H, 4H)

    # Per-step pre-projected gate inputs: x_t @ W_ih^T + (b_ih + b_hh), gathered by token id.
    # NOTE: no runtime bounds check on VMEM refs -> tokens must lie in [0, vocab).
    xg = [xg_tbl_ref[pl.ds(idx_ref[t], 1), :] for t in range(seq_len)]  # seq x (1, 4H)

    # ---- Step 0: h0 = c0 = 0, so the recurrent matmul and the f*c term are exactly zero ----
    g0 = xg[0]
    sig0 = jax.nn.sigmoid(g0)
    tnh0 = jnp.tanh(g0)
    c = sig0[:, 0 * H:1 * H] * tnh0[:, 2 * H:3 * H]   # i * g        (f * c0 == 0)
    h = sig0[:, 3 * H:4 * H] * jnp.tanh(c)            # o * tanh(c)

    # ---- Steps 1..seq-1: fully unrolled so MXU / EUP / VPU work of adjacent steps overlaps ----
    for t in range(1, seq_len):
        gates = jnp.dot(h, w_hh, preferred_element_type=jnp.float32) + xg[t]   # (1, 4H)
        # Two EUP pushes over the full 4H(=128)-lane gate vreg, slice afterwards.
        sig = jax.nn.sigmoid(gates)
        tnh = jnp.tanh(gates)
        i_g = sig[:, 0 * H:1 * H]      # PyTorch gate order [i, f, g, o]
        f_g = sig[:, 1 * H:2 * H]
        g_g = tnh[:, 2 * H:3 * H]
        o_g = sig[:, 3 * H:4 * H]
        c = f_g * c + i_g * g_g
        h = o_g * jnp.tanh(c)

    # ---- Final Linear on the last hidden state (module returns `out`, NOT log-softmax) ----
    out_ref[...] = (jnp.dot(h, w_fc_t_ref[...], preferred_element_type=jnp.float32)
                    + b_fc_ref[...])


def better_lstm_forward(tokens, emb_table, w_ih, w_hh, b_ih, b_hh, w_fc, b_fc):
    """tokens: (seq,) int32.  Returns (1, output_size) float32 (pre-softmax logits)."""
    seq_len = int(tokens.shape[0])
    hidden_size = w_hh.shape[1]
    output_size = w_fc.shape[0]

    # Parameter-only constant folding (glue; done once per parameter set in a real model):
    #   xg_table[v] = emb[v] @ W_ih^T + (b_ih + b_hh)        -- exactly equivalent math.
    emb_f = jnp.asarray(emb_table, jnp.float32)
    xg_table = (emb_f @ jnp.asarray(w_ih, jnp.float32).T
                + jnp.asarray(b_ih + b_hh, jnp.float32)[None, :])      # (vocab, 4H)
    w_hh_t = jnp.asarray(w_hh, jnp.float32).T                          # (H, 4H)
    w_fc_t = jnp.asarray(w_fc, jnp.float32).T                          # (H, out)
    b_fc_r = jnp.asarray(b_fc, jnp.float32)[None, :]                   # (1, out)

    kernel = functools.partial(better_lstm_kernel,
                               seq_len=seq_len, hidden_size=hidden_size)

    vmem = pl.BlockSpec(memory_space=pltpu.MemorySpace.VMEM)
    smem = pl.BlockSpec(memory_space=pltpu.MemorySpace.SMEM)

    return pl.pallas_call(
        kernel,
        out_shape=jax.ShapeDtypeStruct((1, output_size), jnp.float32),
        in_specs=[smem,      # token indices (scalars)
                  vmem,      # fused embedding/input-projection/bias table (vocab, 4H)
                  vmem,      # W_hh^T
                  vmem,      # W_fc^T
                  vmem],     # b_fc
        out_specs=vmem,
    )(tokens.astype(jnp.int32), xg_table, w_hh_t, w_fc_t, b_fc_r)


def _reference_forward(tokens, emb, w_ih, w_hh, b_ih, b_hh, w_fc, b_fc):
    """Pure-numpy reference of the module's forward (batch=1, zero initial state)."""
    tokens = np.asarray(tokens)
    emb = np.asarray(emb, np.float32)
    w_ih = np.asarray(w_ih, np.float32)
    w_hh = np.asarray(w_hh, np.float32)
    b = np.asarray(b_ih, np.float32) + np.asarray(b_hh, np.float32)
    H = w_hh.shape[1]
    h = np.zeros((H,), np.float32)
    c = np.zeros((H,), np.float32)

    def sig(x):
        return 1.0 / (1.0 + np.exp(-x))

    for t in tokens:
        x = emb[int(t)]
        g = x @ w_ih.T + h @ w_hh.T + b
        i, f, gg, o = g[0:H], g[H:2 * H], g[2 * H:3 * H], g[3 * H:4 * H]
        c = sig(f) * c + sig(i) * np.tanh(gg)
        h = sig(o) * np.tanh(c)
    return h @ np.asarray(w_fc, np.float32).T + np.asarray(b_fc, np.float32)


if __name__ == "__main__":
    # Small shapes consistent with the module: vocab=input_size=16, embed=32,
    # hidden=32, output=4 classes, seq_len=8, batch=1 (forced by init_hidden(batch=1)).
    vocab, embed_size, hidden_size, output_size, seq_len = 16, 32, 32, 4, 8

    key = jax.random.PRNGKey(0)
    k_tok, k_emb, k_wih, k_whh, k_bih, k_bhh, k_wfc, k_bfc = jax.random.split(key, 8)

    tokens = jax.random.randint(k_tok, (seq_len,), 0, vocab, dtype=jnp.int32)

    # Deterministic parameter init (PyTorch-style uniform(-1/sqrt(H), 1/sqrt(H)) for LSTM/Linear,
    # normal(0,1) for nn.Embedding).
    emb_table = jax.random.normal(k_emb, (vocab, embed_size), jnp.float32)
    lim = 1.0 / float(np.sqrt(hidden_size))
    w_ih = jax.random.uniform(k_wih, (4 * hidden_size, embed_size), jnp.float32, -lim, lim)
    w_hh = jax.random.uniform(k_whh, (4 * hidden_size, hidden_size), jnp.float32, -lim, lim)
    b_ih = jax.random.uniform(k_bih, (4 * hidden_size,), jnp.float32, -lim, lim)
    b_hh = jax.random.uniform(k_bhh, (4 * hidden_size,), jnp.float32, -lim, lim)
    w_fc = jax.random.uniform(k_wfc, (output_size, hidden_size), jnp.float32, -lim, lim)
    b_fc = jax.random.uniform(k_bfc, (output_size,), jnp.float32, -lim, lim)

    out = better_lstm_forward(tokens, emb_table, w_ih, w_hh, b_ih, b_hh, w_fc, b_fc)
    out = jax.block_until_ready(out)
    assert out.shape == (1, output_size)

    ref = _reference_forward(np.asarray(tokens), emb_table, w_ih, w_hh, b_ih, b_hh, w_fc, b_fc)
    np.testing.assert_allclose(np.asarray(out)[0], ref, rtol=1e-3, atol=1e-3)

    print("KERNEL_OK")
</pallas_src>

<mosaic_0001>
module attributes {stable_mosaic.version = 11 : i64} {
  func.func @better_lstm_kernel(%arg0: memref<8xi32, #tpu.memory_space<smem>>, %arg1: memref<16x128xf32, #tpu.memory_space<vmem>>, %arg2: memref<32x128xf32, #tpu.memory_space<vmem>>, %arg3: memref<32x4xf32, #tpu.memory_space<vmem>>, %arg4: memref<1x4xf32, #tpu.memory_space<vmem>>, %arg5: memref<1x4xf32, #tpu.memory_space<vmem>>) attributes {dimension_semantics = [], scalar_prefetch = 0 : i64, scratch_operands = 0 : i64, tpu.core_type = #tpu.core_type<tc>} {
    %c0 = arith.constant 0 : index
    %c0_0 = arith.constant 0 : index
    %0 = vector.load %arg2[%c0, %c0_0] : memref<32x128xf32, #tpu.memory_space<vmem>>, vector<32x128xf32>
    %c0_1 = arith.constant 0 : index
    %1 = memref.load %arg0[%c0_1] : memref<8xi32, #tpu.memory_space<smem>>
    %2 = arith.index_cast %1 : i32 to index
    %c0_2 = arith.constant 0 : index
    %3 = vector.load %arg1[%2, %c0_2] : memref<16x128xf32, #tpu.memory_space<vmem>>, vector<1x128xf32>
    %c1 = arith.constant 1 : index
    %4 = memref.load %arg0[%c1] : memref<8xi32, #tpu.memory_space<smem>>
    %5 = arith.index_cast %4 : i32 to index
    %c0_3 = arith.constant 0 : index
    %6 = vector.load %arg1[%5, %c0_3] : memref<16x128xf32, #tpu.memory_space<vmem>>, vector<1x128xf32>
    %c2 = arith.constant 2 : index
    %7 = memref.load %arg0[%c2] : memref<8xi32, #tpu.memory_space<smem>>
    %8 = arith.index_cast %7 : i32 to index
    %c0_4 = arith.constant 0 : index
    %9 = vector.load %arg1[%8, %c0_4] : memref<16x128xf32, #tpu.memory_space<vmem>>, vector<1x128xf32>
    %c3 = arith.constant 3 : index
    %10 = memref.load %arg0[%c3] : memref<8xi32, #tpu.memory_space<smem>>
    %11 = arith.index_cast %10 : i32 to index
    %c0_5 = arith.constant 0 : index
    %12 = vector.load %arg1[%11, %c0_5] : memref<16x128xf32, #tpu.memory_space<vmem>>, vector<1x128xf32>
    %c4 = arith.constant 4 : index
    %13 = memref.load %arg0[%c4] : memref<8xi32, #tpu.memory_space<smem>>
    %14 = arith.index_cast %13 : i32 to index
    %c0_6 = arith.constant 0 : index
    %15 = vector.load %arg1[%14, %c0_6] : memref<16x128xf32, #tpu.memory_space<vmem>>, vector<1x128xf32>
    %c5 = arith.constant 5 : index
    %16 = memref.load %arg0[%c5] : memref<8xi32, #tpu.memory_space<smem>>
    %17 = arith.index_cast %16 : i32 to index
    %c0_7 = arith.constant 0 : index
    %18 = vector.load %arg1[%17, %c0_7] : memref<16x128xf32, #tpu.memory_space<vmem>>, vector<1x128xf32>
    %c6 = arith.constant 6 : index
    %19 = memref.load %arg0[%c6] : memref<8xi32, #tpu.memory_space<smem>>
    %20 = arith.index_cast %19 : i32 to index
    %c0_8 = arith.constant 0 : index
    %21 = vector.load %arg1[%20, %c0_8] : memref<16x128xf32, #tpu.memory_space<vmem>>, vector<1x128xf32>
    %c7 = arith.constant 7 : index
    %22 = memref.load %arg0[%c7] : memref<8xi32, #tpu.memory_space<smem>>
    %23 = arith.index_cast %22 : i32 to index
    %c0_9 = arith.constant 0 : index
    %24 = vector.load %arg1[%23, %c0_9] : memref<16x128xf32, #tpu.memory_space<vmem>>, vector<1x128xf32>
    %25 = arith.negf %3 : vector<1x128xf32>
    %26 = math.exp %25 : vector<1x128xf32>
    %cst = arith.constant 1.000000e+00 : f32
    %27 = vector.broadcast %cst : f32 to vector<1x128xf32>
    %28 = arith.addf %27, %26 : vector<1x128xf32>
    %29 = arith.divf %27, %28 : vector<1x128xf32>
    %30 = math.tanh %3 : vector<1x128xf32>
    %31 = vector.extract_strided_slice %29 {offsets = [0, 0], sizes = [1, 32], strides = [1, 1]} : vector<1x128xf32> to vector<1x32xf32>
    %32 = vector.extract_strided_slice %30 {offsets = [0, 64], sizes = [1, 32], strides = [1, 1]} : vector<1x128xf32> to vector<1x32xf32>
    %33 = arith.mulf %31, %32 : vector<1x32xf32>
    %34 = vector.extract_strided_slice %29 {offsets = [0, 96], sizes = [1, 32], strides = [1, 1]} : vector<1x128xf32> to vector<1x32xf32>
    %35 = math.tanh %33 : vector<1x32xf32>
    %36 = arith.mulf %34, %35 : vector<1x32xf32>
    %cst_10 = arith.constant dense<0.000000e+00> : vector<1x128xf32>
    %37 = tpu.matmul %36, %0, %cst_10 {dimension_numbers = #tpu.dot_dimension_numbers<[1], [0], [0], [1], [0, 0, 1, 1], [], []>} : vector<1x32xf32>, vector<32x128xf32>, vector<1x128xf32> -> vector<1x128xf32>
    %38 = arith.addf %37, %6 : vector<1x128xf32>
    %39 = arith.negf %38 : vector<1x128xf32>
    %40 = math.exp %39 : vector<1x128xf32>
    %cst_11 = arith.constant 1.000000e+00 : f32
    %41 = vector.broadcast %cst_11 : f32 to vector<1x128xf32>
    %42 = arith.addf %41, %40 : vector<1x128xf32>
    %43 = arith.divf %41, %42 : vector<1x128xf32>
    %44 = math.tanh %38 : vector<1x128xf32>
    %45 = vector.extract_strided_slice %43 {offsets = [0, 0], sizes = [1, 32], strides = [1, 1]} : vector<1x128xf32> to vector<1x32xf32>
    %46 = vector.extract_strided_slice %43 {offsets = [0, 32], sizes = [1, 32], strides = [1, 1]} : vector<1x128xf32> to vector<1x32xf32>
    %47 = vector.extract_strided_slice %44 {offsets = [0, 64], sizes = [1, 32], strides = [1, 1]} : vector<1x128xf32> to vector<1x32xf32>
    %48 = vector.extract_strided_slice %43 {offsets = [0, 96], sizes = [1, 32], strides = [1, 1]} : vector<1x128xf32> to vector<1x32xf32>
    %49 = arith.mulf %46, %33 : vector<1x32xf32>
    %50 = arith.mulf %45, %47 : vector<1x32xf32>
    %51 = arith.addf %49, %50 : vector<1x32xf32>
    %52 = math.tanh %51 : vector<1x32xf32>
    %53 = arith.mulf %48, %52 : vector<1x32xf32>
    %cst_12 = arith.constant dense<0.000000e+00> : vector<1x128xf32>
    %54 = tpu.matmul %53, %0, %cst_12 {dimension_numbers = #tpu.dot_dimension_numbers<[1], [0], [0], [1], [0, 0, 1, 1], [], []>} : vector<1x32xf32>, vector<32x128xf32>, vector<1x128xf32> -> vector<1x128xf32>
    %55 = arith.addf %54, %9 : vector<1x128xf32>
    %56 = arith.negf %55 : vector<1x128xf32>
    %57 = math.exp %56 : vector<1x128xf32>
    %cst_13 = arith.constant 1.000000e+00 : f32
    %58 = vector.broadcast %cst_13 : f32 to vector<1x128xf32>
    %59 = arith.addf %58, %57 : vector<1x128xf32>
    %60 = arith.divf %58, %59 : vector<1x128xf32>
    %61 = math.tanh %55 : vector<1x128xf32>
    %62 = vector.extract_strided_slice %60 {offsets = [0, 0], sizes = [1, 32], strides = [1, 1]} : vector<1x128xf32> to vector<1x32xf32>
    %63 = vector.extract_strided_slice %60 {offsets = [0, 32], sizes = [1, 32], strides = [1, 1]} : vector<1x128xf32> to vector<1x32xf32>
    %64 = vector.extract_strided_slice %61 {offsets = [0, 64], sizes = [1, 32], strides = [1, 1]} : vector<1x128xf32> to vector<1x32xf32>
    %65 = vector.extract_strided_slice %60 {offsets = [0, 96], sizes = [1, 32], strides = [1, 1]} : vector<1x128xf32> to vector<1x32xf32>
    %66 = arith.mulf %63, %51 : vector<1x32xf32>
    %67 = arith.mulf %62, %64 : vector<1x32xf32>
    %68 = arith.addf %66, %67 : vector<1x32xf32>
    %69 = math.tanh %68 : vector<1x32xf32>
    %70 = arith.mulf %65, %69 : vector<1x32xf32>
    %cst_14 = arith.constant dense<0.000000e+00> : vector<1x128xf32>
    %71 = tpu.matmul %70, %0, %cst_14 {dimension_numbers = #tpu.dot_dimension_numbers<[1], [0], [0], [1], [0, 0, 1, 1], [], []>} : vector<1x32xf32>, vector<32x128xf32>, vector<1x128xf32> -> vector<1x128xf32>
    %72 = arith.addf %71, %12 : vector<1x128xf32>
    %73 = arith.negf %72 : vector<1x128xf32>
    %74 = math.exp %73 : vector<1x128xf32>
    %cst_15 = arith.constant 1.000000e+00 : f32
    %75 = vector.broadcast %cst_15 : f32 to vector<1x128xf32>
    %76 = arith.addf %75, %74 : vector<1x128xf32>
    %77 = arith.divf %75, %76 : vector<1x128xf32>
    %78 = math.tanh %72 : vector<1x128xf32>
    %79 = vector.extract_strided_slice %77 {offsets = [0, 0], sizes = [1, 32], strides = [1, 1]} : vector<1x128xf32> to vector<1x32xf32>
    %80 = vector.extract_strided_slice %77 {offsets = [0, 32], sizes = [1, 32], strides = [1, 1]} : vector<1x128xf32> to vector<1x32xf32>
    %81 = vector.extract_strided_slice %78 {offsets = [0, 64], sizes = [1, 32], strides = [1, 1]} : vector<1x128xf32> to vector<1x32xf32>
    %82 = vector.extract_strided_slice %77 {offsets = [0, 96], sizes = [1, 32], strides = [1, 1]} : vector<1x128xf32> to vector<1x32xf32>
    %83 = arith.mulf %80, %68 : vector<1x32xf32>
    %84 = arith.mulf %79, %81 : vector<1x32xf32>
    %85 = arith.addf %83, %84 : vector<1x32xf32>
    %86 = math.tanh %85 : vector<1x32xf32>
    %87 = arith.mulf %82, %86 : vector<1x32xf32>
    %cst_16 = arith.constant dense<0.000000e+00> : vector<1x128xf32>
    %88 = tpu.matmul %87, %0, %cst_16 {dimension_numbers = #tpu.dot_dimension_numbers<[1], [0], [0], [1], [0, 0, 1, 1], [], []>} : vector<1x32xf32>, vector<32x128xf32>, vector<1x128xf32> -> vector<1x128xf32>
    %89 = arith.addf %88, %15 : vector<1x128xf32>
    %90 = arith.negf %89 : vector<1x128xf32>
    %91 = math.exp %90 : vector<1x128xf32>
    %cst_17 = arith.constant 1.000000e+00 : f32
    %92 = vector.broadcast %cst_17 : f32 to vector<1x128xf32>
    %93 = arith.addf %92, %91 : vector<1x128xf32>
    %94 = arith.divf %92, %93 : vector<1x128xf32>
    %95 = math.tanh %89 : vector<1x128xf32>
    %96 = vector.extract_strided_slice %94 {offsets = [0, 0], sizes = [1, 32], strides = [1, 1]} : vector<1x128xf32> to vector<1x32xf32>
    %97 = vector.extract_strided_slice %94 {offsets = [0, 32], sizes = [1, 32], strides = [1, 1]} : vector<1x128xf32> to vector<1x32xf32>
    %98 = vector.extract_strided_slice %95 {offsets = [0, 64], sizes = [1, 32], strides = [1, 1]} : vector<1x128xf32> to vector<1x32xf32>
    %99 = vector.extract_strided_slice %94 {offsets = [0, 96], sizes = [1, 32], strides = [1, 1]} : vector<1x128xf32> to vector<1x32xf32>
    %100 = arith.mulf %97, %85 : vector<1x32xf32>
    %101 = arith.mulf %96, %98 : vector<1x32xf32>
    %102 = arith.addf %100, %101 : vector<1x32xf32>
    %103 = math.tanh %102 : vector<1x32xf32>
    %104 = arith.mulf %99, %103 : vector<1x32xf32>
    %cst_18 = arith.constant dense<0.000000e+00> : vector<1x128xf32>
    %105 = tpu.matmul %104, %0, %cst_18 {dimension_numbers = #tpu.dot_dimension_numbers<[1], [0], [0], [1], [0, 0, 1, 1], [], []>} : vector<1x32xf32>, vector<32x128xf32>, vector<1x128xf32> -> vector<1x128xf32>
    %106 = arith.addf %105, %18 : vector<1x128xf32>
    %107 = arith.negf %106 : vector<1x128xf32>
    %108 = math.exp %107 : vector<1x128xf32>
    %cst_19 = arith.constant 1.000000e+00 : f32
    %109 = vector.broadcast %cst_19 : f32 to vector<1x128xf32>
    %110 = arith.addf %109, %108 : vector<1x128xf32>
    %111 = arith.divf %109, %110 : vector<1x128xf32>
    %112 = math.tanh %106 : vector<1x128xf32>
    %113 = vector.extract_strided_slice %111 {offsets = [0, 0], sizes = [1, 32], strides = [1, 1]} : vector<1x128xf32> to vector<1x32xf32>
    %114 = vector.extract_strided_slice %111 {offsets = [0, 32], sizes = [1, 32], strides = [1, 1]} : vector<1x128xf32> to vector<1x32xf32>
    %115 = vector.extract_strided_slice %112 {offsets = [0, 64], sizes = [1, 32], strides = [1, 1]} : vector<1x128xf32> to vector<1x32xf32>
    %116 = vector.extract_strided_slice %111 {offsets = [0, 96], sizes = [1, 32], strides = [1, 1]} : vector<1x128xf32> to vector<1x32xf32>
    %117 = arith.mulf %114, %102 : vector<1x32xf32>
    %118 = arith.mulf %113, %115 : vector<1x32xf32>
    %119 = arith.addf %117, %118 : vector<1x32xf32>
    %120 = math.tanh %119 : vector<1x32xf32>
    %121 = arith.mulf %116, %120 : vector<1x32xf32>
    %cst_20 = arith.constant dense<0.000000e+00> : vector<1x128xf32>
    %122 = tpu.matmul %121, %0, %cst_20 {dimension_numbers = #tpu.dot_dimension_numbers<[1], [0], [0], [1], [0, 0, 1, 1], [], []>} : vector<1x32xf32>, vector<32x128xf32>, vector<1x128xf32> -> vector<1x128xf32>
    %123 = arith.addf %122, %21 : vector<1x128xf32>
    %124 = arith.negf %123 : vector<1x128xf32>
    %125 = math.exp %124 : vector<1x128xf32>
    %cst_21 = arith.constant 1.000000e+00 : f32
    %126 = vector.broadcast %cst_21 : f32 to vector<1x128xf32>
    %127 = arith.addf %126, %125 : vector<1x128xf32>
    %128 = arith.divf %126, %127 : vector<1x128xf32>
    %129 = math.tanh %123 : vector<1x128xf32>
    %130 = vector.extract_strided_slice %128 {offsets = [0, 0], sizes = [1, 32], strides = [1, 1]} : vector<1x128xf32> to vector<1x32xf32>
    %131 = vector.extract_strided_slice %128 {offsets = [0, 32], sizes = [1, 32], strides = [1, 1]} : vector<1x128xf32> to vector<1x32xf32>
    %132 = vector.extract_strided_slice %129 {offsets = [0, 64], sizes = [1, 32], strides = [1, 1]} : vector<1x128xf32> to vector<1x32xf32>
    %133 = vector.extract_strided_slice %128 {offsets = [0, 96], sizes = [1, 32], strides = [1, 1]} : vector<1x128xf32> to vector<1x32xf32>
    %134 = arith.mulf %131, %119 : vector<1x32xf32>
    %135 = arith.mulf %130, %132 : vector<1x32xf32>
    %136 = arith.addf %134, %135 : vector<1x32xf32>
    %137 = math.tanh %136 : vector<1x32xf32>
    %138 = arith.mulf %133, %137 : vector<1x32xf32>
    %cst_22 = arith.constant dense<0.000000e+00> : vector<1x128xf32>
    %139 = tpu.matmul %138, %0, %cst_22 {dimension_numbers = #tpu.dot_dimension_numbers<[1], [0], [0], [1], [0, 0, 1, 1], [], []>} : vector<1x32xf32>, vector<32x128xf32>, vector<1x128xf32> -> vector<1x128xf32>
    %140 = arith.addf %139, %24 : vector<1x128xf32>
    %141 = arith.negf %140 : vector<1x128xf32>
    %142 = math.exp %141 : vector<1x128xf32>
    %cst_23 = arith.constant 1.000000e+00 : f32
    %143 = vector.broadcast %cst_23 : f32 to vector<1x128xf32>
    %144 = arith.addf %143, %142 : vector<1x128xf32>
    %145 = arith.divf %143, %144 : vector<1x128xf32>
    %146 = math.tanh %140 : vector<1x128xf32>
    %147 = vector.extract_strided_slice %145 {offsets = [0, 0], sizes = [1, 32], strides = [1, 1]} : vector<1x128xf32> to vector<1x32xf32>
    %148 = vector.extract_strided_slice %145 {offsets = [0, 32], sizes = [1, 32], strides = [1, 1]} : vector<1x128xf32> to vector<1x32xf32>
    %149 = vector.extract_strided_slice %146 {offsets = [0, 64], sizes = [1, 32], strides = [1, 1]} : vector<1x128xf32> to vector<1x32xf32>
    %150 = vector.extract_strided_slice %145 {offsets = [0, 96], sizes = [1, 32], strides = [1, 1]} : vector<1x128xf32> to vector<1x32xf32>
    %151 = arith.mulf %148, %136 : vector<1x32xf32>
    %152 = arith.mulf %147, %149 : vector<1x32xf32>
    %153 = arith.addf %151, %152 : vector<1x32xf32>
    %154 = math.tanh %153 : vector<1x32xf32>
    %155 = arith.mulf %150, %154 : vector<1x32xf32>
    %c0_24 = arith.constant 0 : index
    %c0_25 = arith.constant 0 : index
    %156 = vector.load %arg3[%c0_24, %c0_25] : memref<32x4xf32, #tpu.memory_space<vmem>>, vector<32x4xf32>
    %cst_26 = arith.constant dense<0.000000e+00> : vector<1x4xf32>
    %157 = tpu.matmul %155, %156, %cst_26 {dimension_numbers = #tpu.dot_dimension_numbers<[1], [0], [0], [1], [0, 0, 1, 1], [], []>} : vector<1x32xf32>, vector<32x4xf32>, vector<1x4xf32> -> vector<1x4xf32>
    %c0_27 = arith.constant 0 : index
    %c0_28 = arith.constant 0 : index
    %158 = vector.load %arg4[%c0_27, %c0_28] : memref<1x4xf32, #tpu.memory_space<vmem>>, vector<1x4xf32>
    %159 = arith.addf %157, %158 : vector<1x4xf32>
    %c0_29 = arith.constant 0 : index
    %c0_30 = arith.constant 0 : index
    %160 = vector.load %arg5[%c0_29, %c0_30] : memref<1x4xf32, #tpu.memory_space<vmem>>, vector<1x4xf32>
    tpu.vector_store %arg5[%c0_29, %c0_30], %159 {strides = array<i32>} : memref<1x4xf32, #tpu.memory_space<vmem>>, vector<1x4xf32>,
    return
  }
}

</mosaic_0001>

<llo_original>
// kernel: tpu_custom_call.1
$region0: #{tpu_custom_call.1}
  #allocation0 [shape = 'u32[]', space=smem, size = 0x4, offset = 0x4, fixed_abs, tag = 'smem constant byte address 0x4 - core index']
  #allocation1 [shape = 'u32[72,128]{1,0:T(1,128)}', space=vmem, size = 0x9000, scoped, tag = 'internal scratch']
  %s0 = inlined_call_operand.vmem [shape: s32[8], index: 0, kind: input, shape index: {}]
  %s1 = inlined_call_operand.hbm [shape: f32[16,128], index: 1, kind: input, shape index: {}]
  %s2 = inlined_call_operand.vmem [shape: f32[32,128], index: 2, kind: input, shape index: {}]
  %s3 = inlined_call_operand.vmem [shape: f32[32,4], index: 3, kind: input, shape index: {}]
  %s4 = inlined_call_operand.vmem [shape: f32[1,4], index: 4, kind: input, shape index: {}]
  %s5 = inlined_call_operand.hbm [shape: f32[1,4], index: 5, kind: output, shape index: {}]
  %s6 = sld [smem:[#allocation0]]
  $region38: #{tpu_custom_call.1} parent=0
    _
  %s8 = ssub.s32 1, %s6
  %s9 = scalar_select 0, %s8, %s6
  $region1: #{tpu_custom_call.1} parent=0
    #allocation2 [shape = 'u8[512]{0}', space=smem, size = 0x200, scoped, tag = 'input window, operand 0, single buffered']
    #allocation3 [shape = 's32[1]{0}', space=sflag, size = 0x4, scoped, tag = 'scoped memory for tpu_custom_call.1']
    #allocation4 [shape = 's32[1]{0}', space=sflag, size = 0x4, scoped, tag = 'scoped memory for tpu_custom_call.1']
    #allocation5 [shape = 's32[1]{0}', space=sflag, size = 0x4, scoped, tag = 'scoped memory for tpu_custom_call.1']
    #allocation6 [shape = 'u8[8192]{0}', space=vmem, size = 0x2000, scoped, tag = 'input window, operand 1, single buffered']
    #allocation7 [shape = 'u8[512]{0}', space=vmem, size = 0x400, scoped, tag = 'output window, operand 0, single buffered']
    %10 = vsyncpa [#allocation5], 0
    %11 = vsyncpa [#allocation3], 0
    %12 = vsyncpa [#allocation4], 0
    // Predicated region
    $region2: #{tpu_custom_call.1} parent=1 // pred_check
      _
    $region3: #{tpu_custom_call.1} parent=1 // pred_check_branch
      %14 = sbr.rel (0) target = $region5
    $region4: #{tpu_custom_call.1} parent=1 // pred_region
      %16 = vsyncadd [#allocation5], 0
      %s18 = sshll.u32 %s0, 4
      %s19 = int_to_ptr.vmem [resolvable:$true] %s18
      %21 = dma.vmem_to_smem %s19, 16, [#allocation2], [#allocation5]
    $region5: #{tpu_custom_call.1} parent=1 // pred_fallthru
      _
    // Predicated region
    $region6: #{tpu_custom_call.1} parent=1 // pred_check
      _
    $region7: #{tpu_custom_call.1} parent=1 // pred_check_branch
      %23 = sbr.rel (0) target = $region9
    $region8: #{tpu_custom_call.1} parent=1 // pred_region
      %25 = vsyncadd [#allocation3], 0
      %s26 = sshll.u32 %s1, 4
      %s27 = int_to_ptr.hbm [resolvable:$true] %s26
      %s28 = sshll.u32 [#allocation6], 4
      %s29 = int_to_ptr.vmem [resolvable:$true] %s28
      %34 = dma.hbm_to_vmem [thread:$0]  %s27, 256, %s29, [#allocation3], 128, 128, 8
    $region9: #{tpu_custom_call.1} parent=1 // pred_fallthru
      _
    // Predicated region
    $region10: #{tpu_custom_call.1} parent=1 // pred_check
      _
    $region11: #{tpu_custom_call.1} parent=1 // pred_check_branch
      %36 = sbr.rel (0) target = $region13
    $region12: #{tpu_custom_call.1} parent=1 // pred_region
      _
    $region13: #{tpu_custom_call.1} parent=1 // pred_fallthru
      _
    // Predicated region
    $region14: #{tpu_custom_call.1} parent=1 // pred_check
      _
    $region15: #{tpu_custom_call.1} parent=1 // pred_check_branch
      %38 = sbr.rel (0) target = $region17
    $region16: #{tpu_custom_call.1} parent=1 // pred_region
      _
    $region17: #{tpu_custom_call.1} parent=1 // pred_fallthru
      _
    // Predicated region
    $region18: #{tpu_custom_call.1} parent=1 // pred_check
      _
    $region19: #{tpu_custom_call.1} parent=1 // pred_check_branch
      %40 = sbr.rel (0) target = $region21
    $region20: #{tpu_custom_call.1} parent=1 // pred_region
      _
    $region21: #{tpu_custom_call.1} parent=1 // pred_fallthru
      _
    // Predicated region
    $region22: #{tpu_custom_call.1} parent=1 // pred_check
      _
    $region23: #{tpu_custom_call.1} parent=1 // pred_check_branch
      %42 = sbr.rel (0) target = $region25
    $region24: #{tpu_custom_call.1} parent=1 // pred_region
      %44 = dma.done [#allocation5], 16
    $region25: #{tpu_custom_call.1} parent=1 // pred_fallthru
      _
    // Predicated region
    $region26: #{tpu_custom_call.1} parent=1 // pred_check
      _
    $region27: #{tpu_custom_call.1} parent=1 // pred_check_branch
      %46 = sbr.rel (0) target = $region29
    $region28: #{tpu_custom_call.1} parent=1 // pred_region
      %48 = dma.done [#allocation3], 256
    $region29: #{tpu_custom_call.1} parent=1 // pred_fallthru
      _
    %49 = sfence
    %v50 = vld [vmem:[%s2] sm:$0xff]
    %v51 = vld [vmem:[%s2 + $0x8] sm:$0xff]
    %v52 = vld [vmem:[%s2 + $0x10] sm:$0xff]
    %v53 = vld [vmem:[%s2 + $0x18] sm:$0xff]
    %s54 = sld [smem:[#allocation2]]
    %s55 = scalar_lea.vmem [#allocation6], %s54
    %v56 = vld [vmem:[%s55] sm:$0x1]
    %s57 = sld [smem:[#allocation2 + $0x1]]
    %s58 = scalar_lea.vmem [#allocation6], %s57
    %v59 = vld [vmem:[%s58] sm:$0x1]
    %s60 = sld [smem:[#allocation2 + $0x2]]
    %s61 = scalar_lea.vmem [#allocation6], %s60
    %v62 = vld [vmem:[%s61] sm:$0x1]
    %s63 = sld [smem:[#allocation2 + $0x3]]
    %s64 = scalar_lea.vmem [#allocation6], %s63
    %v65 = vld [vmem:[%s64] sm:$0x1]
    %s66 = sld [smem:[#allocation2 + $0x4]]
    %s67 = scalar_lea.vmem [#allocation6], %s66
    %v68 = vld [vmem:[%s67] sm:$0x1]
    %s69 = sld [smem:[#allocation2 + $0x5]]
    %s70 = scalar_lea.vmem [#allocation6], %s69
    %v71 = vld [vmem:[%s70] sm:$0x1]
    %s72 = sld [smem:[#allocation2 + $0x6]]
    %s73 = scalar_lea.vmem [#allocation6], %s72
    %v74 = vld [vmem:[%s73] sm:$0x1]
    %s75 = sld [smem:[#allocation2 + $0x7]]
    %s76 = scalar_lea.vmem [#allocation6], %s75
    %v77 = vld [vmem:[%s76] sm:$0x1]
    %v78 = vxor.u32 %v56, 2147483648
    %v79 = vmul.f32 %v78, 1.442695
    %v80 = vpow.pop %v79
    %v81 = vadd.f32 %v80, 1.0
    %v82 = vrcp.pop %v81
    %v83 = vmul.f32 %v81, %v82
    %v84 = vsub.f32 1.0, %v83
    %v85 = vmul.f32 %v82, %v84
    %v86 = vadd.f32 %v82, %v85
    %vm87 = vweird.f32 %v81
    %vm88 = vweird.f32 %v82
    %vm89 = vmor %vm87, %vm88
    %v90 = vsel %vm89, %v82, %v86
    %v91 = vand.u32 2147483647, %v81
    %vm92 = vcmp.eq.f32.partialorder %v91, 8.507059e+37
    %v93 = vand.u32 %v81, 2147483648
    %v94 = vor.u32 1.1754944e-38, %v93
    %v95 = vsel %vm92, %v94, %v90
    %v96 = vmul.f32 1.0, %v95
    %v97 = vtanh.pop %v56
    %99 = vrot.lane.b32.xlu0 %v97, 64
    %v100 = vpop.permute.xlu0 %99
    %v102 = vmul.f32 %v96, %v100
    %v103 = vtanh.pop %v102
    %105 = vrot.lane.b32.xlu0 %v103, 96
    %v106 = vpop.permute.xlu0 %105
    %v108 = vmul.f32 %v96, %v106
    %110 = vrot.lane.b32.xlu0 %v108, 32
    %v111 = vpop.permute.xlu0 %110
    %vm112 = vcmask 261120
    %v113 = vsel %vm112, %v111, 0
    %115 = vmatpush.msra.mxu0 0.0
    %116 = vmatpush.msra.mxu0 0.0
    %117 = vmatpush.msra.mxu0 0.0
    %118 = vmatpush.msra.mxu0 0.0
    %119 = vmatpush.msra.mxu0 0.0
    %120 = vmatpush.msra.mxu0 0.0
    %121 = vmatpush.msra.mxu0 0.0
    %122 = vmatpush.msra.mxu0 0.0
    %123 = vmatpush.msra.mxu0 0.0
    %124 = vmatpush.msra.mxu0 0.0
    %125 = vmatpush.msra.mxu0 0.0
    %126 = vmatpush.msra.mxu0 0.0
    %127 = vmatpush.msra.mxu0 %v53
    %128 = vmatpush.msra.mxu0 %v52
    %129 = vmatpush.msra.mxu0 %v51
    %130 = vmatpush.msra.mxu0 %v50
    %131 = vmatmul.f32.gmra.mxu0 %v113
    %v132 = vpop.f32.mrf.mxu0
    %v133 = vadd.f32 %v59, %v132
    %134 = vdwg.mxu0
    %v135 = vxor.u32 %v133, 2147483648
    %v136 = vmul.f32 %v135, 1.442695
    %v137 = vpow.pop %v136
    %v138 = vadd.f32 %v137, 1.0
    %v139 = vrcp.pop %v138
    %v140 = vmul.f32 %v138, %v139
    %v141 = vsub.f32 1.0, %v140
    %v142 = vmul.f32 %v139, %v141
    %v143 = vadd.f32 %v139, %v142
    %vm144 = vweird.f32 %v138
    %vm145 = vweird.f32 %v139
    %vm146 = vmor %vm144, %vm145
    %v147 = vsel %vm146, %v139, %v143
    %v148 = vand.u32 2147483647, %v138
    %vm149 = vcmp.eq.f32.partialorder %v148, 8.507059e+37
    %v150 = vand.u32 %v138, 2147483648
    %v151 = vor.u32 1.1754944e-38, %v150
    %v152 = vsel %vm149, %v151, %v147
    %v153 = vmul.f32 1.0, %v152
    %v154 = vtanh.pop %v133
    %156 = vrot.lane.b32.xlu0 %v102, 32
    %v157 = vpop.permute.xlu0 %156
    %v159 = vmul.f32 %v153, %v157
    %161 = vrot.lane.b32.xlu0 %v154, 64
    %v162 = vpop.permute.xlu0 %161
    %v164 = vmul.f32 %v153, %v162
    %166 = vrot.lane.b32.xlu0 %v164, 32
    %v167 = vpop.permute.xlu0 %166
    %v169 = vadd.f32 %v159, %v167
    %v170 = vtanh.pop %v169
    %172 = vrot.lane.b32.xlu0 %v170, 64
    %v173 = vpop.permute.xlu0 %172
    %v175 = vmul.f32 %v153, %v173
    %177 = vrot.lane.b32.xlu0 %v175, 32
    %v178 = vpop.permute.xlu0 %177
    %v179 = vsel %vm112, %v178, 0
    %181 = vmatpush.msra.mxu0 0.0
    %182 = vmatpush.msra.mxu0 0.0
    %183 = vmatpush.msra.mxu0 0.0
    %184 = vmatpush.msra.mxu0 0.0
    %185 = vmatpush.msra.mxu0 0.0
    %186 = vmatpush.msra.mxu0 0.0
    %187 = vmatpush.msra.mxu0 0.0
    %188 = vmatpush.msra.mxu0 0.0
    %189 = vmatpush.msra.mxu0 0.0
    %190 = vmatpush.msra.mxu0 0.0
    %191 = vmatpush.msra.mxu0 0.0
    %192 = vmatpush.msra.mxu0 0.0
    %193 = vmatpush.msra.mxu0 %v53
    %194 = vmatpush.msra.mxu0 %v52
    %195 = vmatpush.msra.mxu0 %v51
    %196 = vmatpush.msra.mxu0 %v50
    %197 = vmatmul.f32.gmra.mxu0 %v179
    %v198 = vpop.f32.mrf.mxu0
    %v199 = vadd.f32 %v62, %v198
    %200 = vdwg.mxu0
    %v201 = vxor.u32 %v199, 2147483648
    %v202 = vmul.f32 %v201, 1.442695
    %v203 = vpow.pop %v202
    %v204 = vadd.f32 %v203, 1.0
    %v205 = vrcp.pop %v204
    %v206 = vmul.f32 %v204, %v205
    %v207 = vsub.f32 1.0, %v206
    %v208 = vmul.f32 %v205, %v207
    %v209 = vadd.f32 %v205, %v208
    %vm210 = vweird.f32 %v204
    %vm211 = vweird.f32 %v205
    %vm212 = vmor %vm210, %vm211
    %v213 = vsel %vm212, %v205, %v209
    %v214 = vand.u32 2147483647, %v204
    %vm215 = vcmp.eq.f32.partialorder %v214, 8.507059e+37
    %v216 = vand.u32 %v204, 2147483648
    %v217 = vor.u32 1.1754944e-38, %v216
    %v218 = vsel %vm215, %v217, %v213
    %v219 = vmul.f32 1.0, %v218
    %v220 = vtanh.pop %v199
    %v221 = vmul.f32 %v219, %v169
    %223 = vrot.lane.b32.xlu0 %v220, 64
    %v224 = vpop.permute.xlu0 %223
    %v226 = vmul.f32 %v219, %v224
    %228 = vrot.lane.b32.xlu0 %v226, 32
    %v229 = vpop.permute.xlu0 %228
    %v231 = vadd.f32 %v221, %v229
    %v232 = vtanh.pop %v231
    %234 = vrot.lane.b32.xlu0 %v232, 64
    %v235 = vpop.permute.xlu0 %234
    %v237 = vmul.f32 %v219, %v235
    %239 = vrot.lane.b32.xlu0 %v237, 32
    %v240 = vpop.permute.xlu0 %239
    %v241 = vsel %vm112, %v240, 0
    %243 = vmatpush.msra.mxu0 0.0
    %244 = vmatpush.msra.mxu0 0.0
    %245 = vmatpush.msra.mxu0 0.0
    %246 = vmatpush.msra.mxu0 0.0
    %247 = vmatpush.msra.mxu0 0.0
    %248 = vmatpush.msra.mxu0 0.0
    %249 = vmatpush.msra.mxu0 0.0
    %250 = vmatpush.msra.mxu0 0.0
    %251 = vmatpush.msra.mxu0 0.0
    %252 = vmatpush.msra.mxu0 0.0
    %253 = vmatpush.msra.mxu0 0.0
    %254 = vmatpush.msra.mxu0 0.0
    %255 = vmatpush.msra.mxu0 %v53
    %256 = vmatpush.msra.mxu0 %v52
    %257 = vmatpush.msra.mxu0 %v51
    %258 = vmatpush.msra.mxu0 %v50
    %259 = vmatmul.f32.gmra.mxu0 %v241
    %v260 = vpop.f32.mrf.mxu0
    %v261 = vadd.f32 %v65, %v260
    %262 = vdwg.mxu0
    %v263 = vxor.u32 %v261, 2147483648
    %v264 = vmul.f32 %v263, 1.442695
    %v265 = vpow.pop %v264
    %v266 = vadd.f32 %v265, 1.0
    %v267 = vrcp.pop %v266
    %v268 = vmul.f32 %v266, %v267
    %v269 = vsub.f32 1.0, %v268
    %v270 = vmul.f32 %v267, %v269
    %v271 = vadd.f32 %v267, %v270
    %vm272 = vweird.f32 %v266
    %vm273 = vweird.f32 %v267
    %vm274 = vmor %vm272, %vm273
    %v275 = vsel %vm274, %v267, %v271
    %v276 = vand.u32 2147483647, %v266
    %vm277 = vcmp.eq.f32.partialorder %v276, 8.507059e+37
    %v278 = vand.u32 %v266, 2147483648
    %v279 = vor.u32 1.1754944e-38, %v278
    %v280 = vsel %vm277, %v279, %v275
    %v281 = vmul.f32 1.0, %v280
    %v282 = vtanh.pop %v261
    %v283 = vmul.f32 %v281, %v231
    %285 = vrot.lane.b32.xlu0 %v282, 64
    %v286 = vpop.permute.xlu0 %285
    %v288 = vmul.f32 %v281, %v286
    %290 = vrot.lane.b32.xlu0 %v288, 32
    %v291 = vpop.permute.xlu0 %290
    %v293 = vadd.f32 %v283, %v291
    %v294 = vtanh.pop %v293
    %296 = vrot.lane.b32.xlu0 %v294, 64
    %v297 = vpop.permute.xlu0 %296
    %v299 = vmul.f32 %v281, %v297
    %301 = vrot.lane.b32.xlu0 %v299, 32
    %v302 = vpop.permute.xlu0 %301
    %v303 = vsel %vm112, %v302, 0
    %305 = vmatpush.msra.mxu0 0.0
    %306 = vmatpush.msra.mxu0 0.0
    %307 = vmatpush.msra.mxu0 0.0
    %308 = vmatpush.msra.mxu0 0.0
    %309 = vmatpush.msra.mxu0 0.0
    %310 = vmatpush.msra.mxu0 0.0
    %311 = vmatpush.msra.mxu0 0.0
    %312 = vmatpush.msra.mxu0 0.0
    %313 = vmatpush.msra.mxu0 0.0
    %314 = vmatpush.msra.mxu0 0.0
    %315 = vmatpush.msra.mxu0 0.0
    %316 = vmatpush.msra.mxu0 0.0
    %317 = vmatpush.msra.mxu0 %v53
    %318 = vmatpush.msra.mxu0 %v52
    %319 = vmatpush.msra.mxu0 %v51
    %320 = vmatpush.msra.mxu0 %v50
    %321 = vmatmul.f32.gmra.mxu0 %v303
    %v322 = vpop.f32.mrf.mxu0
    %v323 = vadd.f32 %v68, %v322
    %324 = vdwg.mxu0
    %v325 = vxor.u32 %v323, 2147483648
    %v326 = vmul.f32 %v325, 1.442695
    %v327 = vpow.pop %v326
    %v328 = vadd.f32 %v327, 1.0
    %v329 = vrcp.pop %v328
    %v330 = vmul.f32 %v328, %v329
    %v331 = vsub.f32 1.0, %v330
    %v332 = vmul.f32 %v329, %v331
    %v333 = vadd.f32 %v329, %v332
    %vm334 = vweird.f32 %v328
    %vm335 = vweird.f32 %v329
    %vm336 = vmor %vm334, %vm335
    %v337 = vsel %vm336, %v329, %v333
    %v338 = vand.u32 2147483647, %v328
    %vm339 = vcmp.eq.f32.partialorder %v338, 8.507059e+37
    %v340 = vand.u32 %v328, 2147483648
    %v341 = vor.u32 1.1754944e-38, %v340
    %v342 = vsel %vm339, %v341, %v337
    %v343 = vmul.f32 1.0, %v342
    %v344 = vtanh.pop %v323
    %v345 = vmul.f32 %v343, %v293
    %347 = vrot.lane.b32.xlu0 %v344, 64
    %v348 = vpop.permute.xlu0 %347
    %v350 = vmul.f32 %v343, %v348
    %352 = vrot.lane.b32.xlu0 %v350, 32
    %v353 = vpop.permute.xlu0 %352
    %v355 = vadd.f32 %v345, %v353
    %v356 = vtanh.pop %v355
    %358 = vrot.lane.b32.xlu0 %v356, 64
    %v359 = vpop.permute.xlu0 %358
    %v361 = vmul.f32 %v343, %v359
    %363 = vrot.lane.b32.xlu0 %v361, 32
    %v364 = vpop.permute.xlu0 %363
    %v365 = vsel %vm112, %v364, 0
    %367 = vmatpush.msra.mxu0 0.0
    %368 = vmatpush.msra.mxu0 0.0
    %369 = vmatpush.msra.mxu0 0.0
    %370 = vmatpush.msra.mxu0 0.0
    %371 = vmatpush.msra.mxu0 0.0
    %372 = vmatpush.msra.mxu0 0.0
    %373 = vmatpush.msra.mxu0 0.0
    %374 = vmatpush.msra.mxu0 0.0
    %375 = vmatpush.msra.mxu0 0.0
    %376 = vmatpush.msra.mxu0 0.0
    %377 = vmatpush.msra.mxu0 0.0
    %378 = vmatpush.msra.mxu0 0.0
    %379 = vmatpush.msra.mxu0 %v53
    %380 = vmatpush.msra.mxu0 %v52
    %381 = vmatpush.msra.mxu0 %v51
    %382 = vmatpush.msra.mxu0 %v50
    %383 = vmatmul.f32.gmra.mxu0 %v365
    %v384 = vpop.f32.mrf.mxu0
    %v385 = vadd.f32 %v71, %v384
    %386 = vdwg.mxu0
    %v387 = vxor.u32 %v385, 2147483648
    %v388 = vmul.f32 %v387, 1.442695
    %v389 = vpow.pop %v388
    %v390 = vadd.f32 %v389, 1.0
    %v391 = vrcp.pop %v390
    %v392 = vmul.f32 %v390, %v391
    %v393 = vsub.f32 1.0, %v392
    %v394 = vmul.f32 %v391, %v393
    %v395 = vadd.f32 %v391, %v394
    %vm396 = vweird.f32 %v390
    %vm397 = vweird.f32 %v391
    %vm398 = vmor %vm396, %vm397
    %v399 = vsel %vm398, %v391, %v395
    %v400 = vand.u32 2147483647, %v390
    %vm401 = vcmp.eq.f32.partialorder %v400, 8.507059e+37
    %v402 = vand.u32 %v390, 2147483648
    %v403 = vor.u32 1.1754944e-38, %v402
    %v404 = vsel %vm401, %v403, %v399
    %v405 = vmul.f32 1.0, %v404
    %v406 = vtanh.pop %v385
    %v407 = vmul.f32 %v405, %v355
    %409 = vrot.lane.b32.xlu0 %v406, 64
    %v410 = vpop.permute.xlu0 %409
    %v412 = vmul.f32 %v405, %v410
    %414 = vrot.lane.b32.xlu0 %v412, 32
    %v415 = vpop.permute.xlu0 %414
    %v417 = vadd.f32 %v407, %v415
    %v418 = vtanh.pop %v417
    %420 = vrot.lane.b32.xlu0 %v418, 64
    %v421 = vpop.permute.xlu0 %420
    %v423 = vmul.f32 %v405, %v421
    %425 = vrot.lane.b32.xlu0 %v423, 32
    %v426 = vpop.permute.xlu0 %425
    %v427 = vsel %vm112, %v426, 0
    %429 = vmatpush.msra.mxu0 0.0
    %430 = vmatpush.msra.mxu0 0.0
    %431 = vmatpush.msra.mxu0 0.0
    %432 = vmatpush.msra.mxu0 0.0
    %433 = vmatpush.msra.mxu0 0.0
    %434 = vmatpush.msra.mxu0 0.0
    %435 = vmatpush.msra.mxu0 0.0
    %436 = vmatpush.msra.mxu0 0.0
    %437 = vmatpush.msra.mxu0 0.0
    %438 = vmatpush.msra.mxu0 0.0
    %439 = vmatpush.msra.mxu0 0.0
    %440 = vmatpush.msra.mxu0 0.0
    %441 = vmatpush.msra.mxu0 %v53
    %442 = vmatpush.msra.mxu0 %v52
    %443 = vmatpush.msra.mxu0 %v51
    %444 = vmatpush.msra.mxu0 %v50
    %445 = vmatmul.f32.gmra.mxu0 %v427
    %v446 = vpop.f32.mrf.mxu0
    %v447 = vadd.f32 %v74, %v446
    %448 = vdwg.mxu0
    %v449 = vxor.u32 %v447, 2147483648
    %v450 = vmul.f32 %v449, 1.442695
    %v451 = vpow.pop %v450
    %v452 = vadd.f32 %v451, 1.0
    %v453 = vrcp.pop %v452
    %v454 = vmul.f32 %v452, %v453
    %v455 = vsub.f32 1.0, %v454
    %v456 = vmul.f32 %v453, %v455
    %v457 = vadd.f32 %v453, %v456
    %vm458 = vweird.f32 %v452
    %vm459 = vweird.f32 %v453
    %vm460 = vmor %vm458, %vm459
    %v461 = vsel %vm460, %v453, %v457
    %v462 = vand.u32 2147483647, %v452
    %vm463 = vcmp.eq.f32.partialorder %v462, 8.507059e+37
    %v464 = vand.u32 %v452, 2147483648
    %v465 = vor.u32 1.1754944e-38, %v464
    %v466 = vsel %vm463, %v465, %v461
    %v467 = vmul.f32 1.0, %v466
    %v468 = vtanh.pop %v447
    %v469 = vmul.f32 %v467, %v417
    %471 = vrot.lane.b32.xlu0 %v468, 64
    %v472 = vpop.permute.xlu0 %471
    %v474 = vmul.f32 %v467, %v472
    %476 = vrot.lane.b32.xlu0 %v474, 32
    %v477 = vpop.permute.xlu0 %476
    %v479 = vadd.f32 %v469, %v477
    %v480 = vtanh.pop %v479
    %482 = vrot.lane.b32.xlu0 %v480, 64
    %v483 = vpop.permute.xlu0 %482
    %v485 = vmul.f32 %v467, %v483
    %487 = vrot.lane.b32.xlu0 %v485, 32
    %v488 = vpop.permute.xlu0 %487
    %v489 = vsel %vm112, %v488, 0
    %491 = vmatpush.msra.mxu0 0.0
    %492 = vmatpush.msra.mxu0 0.0
    %493 = vmatpush.msra.mxu0 0.0
    %494 = vmatpush.msra.mxu0 0.0
    %495 = vmatpush.msra.mxu0 0.0
    %496 = vmatpush.msra.mxu0 0.0
    %497 = vmatpush.msra.mxu0 0.0
    %498 = vmatpush.msra.mxu0 0.0
    %499 = vmatpush.msra.mxu0 0.0
    %500 = vmatpush.msra.mxu0 0.0
    %501 = vmatpush.msra.mxu0 0.0
    %502 = vmatpush.msra.mxu0 0.0
    %503 = vmatpush.msra.mxu0 %v53
    %504 = vmatpush.msra.mxu0 %v52
    %505 = vmatpush.msra.mxu0 %v51
    %506 = vmatpush.msra.mxu0 %v50
    %507 = vmatmul.f32.gmra.mxu0 %v489
    %v508 = vpop.f32.mrf.mxu0
    %v509 = vadd.f32 %v77, %v508
    %510 = vdwg.mxu0
    %v511 = vxor.u32 %v509, 2147483648
    %v512 = vmul.f32 %v511, 1.442695
    %v513 = vpow.pop %v512
    %v514 = vadd.f32 %v513, 1.0
    %v515 = vrcp.pop %v514
    %v516 = vmul.f32 %v514, %v515
    %v517 = vsub.f32 1.0, %v516
    %v518 = vmul.f32 %v515, %v517
    %v519 = vadd.f32 %v515, %v518
    %vm520 = vweird.f32 %v514
    %vm521 = vweird.f32 %v515
    %vm522 = vmor %vm520, %vm521
    %v523 = vsel %vm522, %v515, %v519
    %v524 = vand.u32 2147483647, %v514
    %vm525 = vcmp.eq.f32.partialorder %v524, 8.507059e+37
    %v526 = vand.u32 %v514, 2147483648
    %v527 = vor.u32 1.1754944e-38, %v526
    %v528 = vsel %vm525, %v527, %v523
    %v529 = vmul.f32 1.0, %v528
    %v530 = vtanh.pop %v509
    %v531 = vmul.f32 %v529, %v479
    %533 = vrot.lane.b32.xlu0 %v530, 64
    %v534 = vpop.permute.xlu0 %533
    %v536 = vmul.f32 %v529, %v534
    %538 = vrot.lane.b32.xlu0 %v536, 32
    %v539 = vpop.permute.xlu0 %538
    %v541 = vadd.f32 %v531, %v539
    %v542 = vtanh.pop %v541
    %544 = vrot.lane.b32.xlu0 %v542, 64
    %v545 = vpop.permute.xlu0 %544
    %v547 = vmul.f32 %v529, %v545
    %v548 = vld [vmem:[%s3] sm:$0xff]
    %v549 = vld [vmem:[%s3 + $0x8] sm:$0xff]
    %v550 = vld [vmem:[%s3 + $0x10] sm:$0xff]
    %v551 = vld [vmem:[%s3 + $0x18] sm:$0xff]
    %v552 = vld [vmem:[%s4] sm:$0x1]
    %554 = vrot.lane.b32.xlu0 %v547, 32
    %v555 = vpop.permute.xlu0 %554
    %v556 = vsel %vm112, %v555, 0
    %558 = vmatpush.msra.mxu0 0.0
    %559 = vmatpush.msra.mxu0 0.0
    %560 = vmatpush.msra.mxu0 0.0
    %561 = vmatpush.msra.mxu0 0.0
    %562 = vmatpush.msra.mxu0 0.0
    %563 = vmatpush.msra.mxu0 0.0
    %564 = vmatpush.msra.mxu0 0.0
    %565 = vmatpush.msra.mxu0 0.0
    %566 = vmatpush.msra.mxu0 0.0
    %567 = vmatpush.msra.mxu0 0.0
    %568 = vmatpush.msra.mxu0 0.0
    %569 = vmatpush.msra.mxu0 0.0
    %570 = vmatpush.msra.mxu0 %v551
    %571 = vmatpush.msra.mxu0 %v550
    %572 = vmatpush.msra.mxu0 %v549
    %573 = vmatpush.msra.mxu0 %v548
    %574 = vmatmul.f32.gmra.mxu0 %v556
    %v575 = vpop.f32.mrf.mxu0
    %v576 = vadd.f32 %v552, %v575
    %577 = vdwg.mxu0
    %vm578 = vcmask 24576
    %579 = vst.msk [vmem:[#allocation7] sm:$0x1] %vm578, %v576
    // Predicated region
    $region30: #{tpu_custom_call.1} parent=1 // pred_check
      _
    $region31: #{tpu_custom_call.1} parent=1 // pred_check_branch
      %581 = sbr.rel (0) target = $region33
    $region32: #{tpu_custom_call.1} parent=1 // pred_region
      %583 = vsyncadd [#allocation4], 0
      %s585 = sshll.u32 [#allocation7], 4
      %s586 = int_to_ptr.vmem [resolvable:$true] %s585
      %s587 = sshll.u32 %s5, 4
      %s588 = int_to_ptr.hbm [resolvable:$true] %s587
      %590 = dma.vmem_to_hbm [thread:$0]  %s586, 16, %s588, [#allocation4]
    $region33: #{tpu_custom_call.1} parent=1 // pred_fallthru
      _
    // Predicated region
    $region34: #{tpu_custom_call.1} parent=1 // pred_check
      _
    $region35: #{tpu_custom_call.1} parent=1 // pred_check_branch
      %592 = sbr.rel (0) target = $region37
    $region36: #{tpu_custom_call.1} parent=1 // pred_region
      %594 = dma.done [#allocation4], 16
    $region37: #{tpu_custom_call.1} parent=1 // pred_fallthru
      _
    %595 = vsyncpa [#allocation3], 1
    %596 = vsyncpa [#allocation4], 1
    %597 = vsyncpa [#allocation5], 1

</llo_original>
